<compile_context>
chip_gen: v7x
topology: tpu7x:2x2x1
jax: 0.10.0
libtpu: 0.0.40
codegen_flags: <defaults>
</compile_context>

<pallas_src>
import functools

import jax
import jax.numpy as jnp
from jax import lax
from jax.experimental import pallas as pl
from jax.experimental.pallas import tpu as pltpu


def _round_up(x, m):
    return ((x + m - 1) // m) * m


# ~40 MiB tile budget (fits v7x 64 MiB per-TC VMEM with headroom; reaches HBM
# roofline with >=512-wide tiles), and an explicit scoped-VMEM request so v5e's
# 16 MiB default never forces tiny tiles.
_VMEM_TILE_BUDGET = 40 << 20
_VMEM_LIMIT_BYTES = 48 << 20


def _step_footprint_bytes(tn, tc, d):
    """Double-buffered per-grid-step VMEM footprint estimate."""
    d_pad = _round_up(d, 128)
    return (2 * d_pad * tc * 2        # weight tile, bf16, double-buffered
            + 2 * tn * d_pad * 4      # z tile, f32
            + 2 * tn * tc * 4         # out tile, f32
            + 2 * 8 * tc * 4          # bias (1, tc) pads to 8 sublanes
            + 4 * 8 * d_pad * 4)      # mean + inv_std


def _pick_tiles(n, d, c_pad, budget=_VMEM_TILE_BUDGET):
    """Pick (tn, tc, n_pad): biggest tiles that fit the VMEM budget.

    tc is a multiple of 256 that divides c_pad (so the whole head -> one tile
    -> grid=(.,1) when it fits: no per-step overhead on single-TC chips).
    tn is sublane-aligned; N is padded up to a multiple of tn.
    """
    n_pad8 = _round_up(max(n, 1), 8)
    m = c_pad // 256
    tc_candidates = sorted({256 * k for k in range(1, m + 1) if m % k == 0},
                           reverse=True)
    for tn_cap in (512, 256, 128, 64, 32, 16, 8):
        tn = min(tn_cap, n_pad8)
        for tc in tc_candidates:
            if _step_footprint_bytes(tn, tc, d) <= budget:
                return tn, tc, _round_up(n_pad8, tn)
    # Fallback: smallest tiles.
    tn = min(8, n_pad8)
    return tn, 256, _round_up(n_pad8, tn)


def linprob_kernel(z_ref, mean_ref, inv_std_ref, wt_ref, b_ref, o_ref):
    # z_ref: (tn, D) f32 | mean/inv_std: (1, D) f32 | wt_ref: (D, tc) bf16
    # b_ref: (1, tc) f32 | o_ref: (tn, tc) f32
    # BN apply (stats precomputed in the wrapper): cheap VPU filler under the
    # weight DMA, recomputed per C tile instead of staged in scratch.
    z_norm = (z_ref[...] - mean_ref[...]) * inv_std_ref[...]
    # Linear head on the MXU: bf16 x bf16 -> f32 accumulate.
    logits = jnp.dot(z_norm.astype(wt_ref.dtype), wt_ref[...],
                     preferred_element_type=jnp.float32)
    o_ref[...] = (logits + b_ref[...]).astype(o_ref.dtype)


def prepare_params(w, b, weight_dtype=jnp.bfloat16):
    """One-time head-param prep (do NOT call per forward step).

    w: (C, D) PyTorch Linear layout, b: (C,).
    Returns (w_t, b_pad): weight transposed to (D, C_pad) in `weight_dtype`
    (C zero-padded to a multiple of 256) and bias as (1, C_pad) f32.
    Padded columns are zero-weight/zero-bias -> logit 0; they are sliced off in
    the forward.  If you skip the slice and feed softmax/CE, mask them instead.
    """
    C, D = w.shape
    c_pad = _round_up(C, 256)  # full MXU width on v6e/v7x; fine (2x128) on v5e
    w_t = jnp.zeros((D, c_pad), weight_dtype)
    w_t = w_t.at[:, :C].set(jnp.transpose(w).astype(weight_dtype))
    b_pad = jnp.zeros((1, c_pad), jnp.float32)
    b_pad = b_pad.at[:, :C].set(b.astype(jnp.float32))
    return w_t, b_pad


@functools.partial(jax.jit, static_argnames=("num_classes", "eps"))
def linprob_forward_prepared(z, w_t, b_pad, *, num_classes, eps=1e-6):
    """z: (N, D) f32, w_t: (D, C_pad) bf16 (prepared), b_pad: (1, C_pad) f32."""
    N, D = z.shape
    D_w, c_pad = w_t.shape
    assert D_w == D and c_pad % 256 == 0 and num_classes <= c_pad

    # Training-mode BatchNorm1d stats (batch mean, biased variance), hoisted
    # out of the kernel as a tiny XLA reduction over (N, D).
    mean = jnp.mean(z, axis=0, keepdims=True)                 # (1, D)
    var = jnp.mean(jnp.square(z - mean), axis=0, keepdims=True)
    inv_std = lax.rsqrt(var + eps)                            # (1, D)

    tn, tc, n_pad = _pick_tiles(N, D, c_pad)
    assert c_pad % tc == 0 and n_pad % tn == 0 and tc % 128 == 0 and tn % 8 == 0
    if n_pad != N:
        # Padded rows are normalized with the real batch stats and discarded.
        z = jnp.pad(z, ((0, n_pad - N), (0, 0)))
    grid = (n_pad // tn, c_pad // tc)

    out_pad = pl.pallas_call(
        linprob_kernel,
        out_shape=jax.ShapeDtypeStruct((n_pad, c_pad), jnp.float32),
        grid_spec=pltpu.PrefetchScalarGridSpec(
            num_scalar_prefetch=0,
            grid=grid,
            in_specs=[
                pl.BlockSpec((tn, D), lambda i, j: (i, 0)),    # z tile
                pl.BlockSpec((1, D), lambda i, j: (0, 0)),     # mean (resident)
                pl.BlockSpec((1, D), lambda i, j: (0, 0)),     # inv_std (resident)
                pl.BlockSpec((D, tc), lambda i, j: (0, j)),    # weight (streamed)
                pl.BlockSpec((1, tc), lambda i, j: (0, j)),    # bias
            ],
            out_specs=pl.BlockSpec((tn, tc), lambda i, j: (i, j)),
        ),
        compiler_params=pltpu.CompilerParams(
            dimension_semantics=("parallel", "parallel"),      # v7x: shard over 2 TCs
            vmem_limit_bytes=_VMEM_LIMIT_BYTES),
    )(z, mean, inv_std, w_t, b_pad)

    # Slice back to logical shape.  For very large N, fuse this slice (or a
    # padded-column mask) into the consumer instead to avoid an extra HBM pass.
    return out_pad[:N, :num_classes]


def linprob_forward(z, w, b, eps=1e-6):
    """Convenience one-shot API. Prefer prepare_params() once +
    linprob_forward_prepared() in a loop so the transpose/pad/cast is hoisted."""
    w_t, b_pad = prepare_params(w, b)
    return linprob_forward_prepared(z, w_t, b_pad, num_classes=w.shape[0], eps=eps)


def init_params(key, in_dim, num_classes):
    kw, kb = jax.random.split(key)
    # trunc_normal_(std=0.01), truncated to +/- 2 std.
    w = 0.01 * jax.random.truncated_normal(
        kw, -2.0, 2.0, (num_classes, in_dim), dtype=jnp.float32)
    # PyTorch Linear default bias init: U(-1/sqrt(in_dim), 1/sqrt(in_dim)).
    bound = 1.0 / jnp.sqrt(jnp.float32(in_dim))
    b = jax.random.uniform(kb, (num_classes,), dtype=jnp.float32,
                           minval=-bound, maxval=bound)
    return w, b


if __name__ == "__main__":
    key = jax.random.PRNGKey(0)
    k_z, k_p = jax.random.split(key)

    N, D, C = 8, 32, 1000  # batch=8, in_dim=32, num_classes=1000
    z = jax.random.normal(k_z, (N, D), dtype=jnp.float32)
    w, b = init_params(k_p, D, C)

    # One-time prep (transpose + 256-pad + bf16 cast), hoisted out of the
    # per-call forward path.
    w_t, b_pad = prepare_params(w, b)

    out = linprob_forward_prepared(z, w_t, b_pad, num_classes=C)
    jax.block_until_ready(out)

    # Pure-JAX reference against the same bf16-stored weights (bf16 storage is
    # the deliberate format; MXU accumulates in f32).
    # TODO(synk): running_mean/running_var tracking of BatchNorm1d is not
    # implemented (forward-only training-mode batch stats, as in the module).
    mean = jnp.mean(z, axis=0, keepdims=True)
    var = jnp.mean((z - mean) ** 2, axis=0, keepdims=True)
    z_norm = (z - mean) / jnp.sqrt(var + 1e-6)
    ref = z_norm @ w_t[:, :C].astype(jnp.float32) + b

    assert out.shape == (N, C)
    err = float(jnp.max(jnp.abs(out - ref)))
    assert err < 5e-3, f"max abs err {err}"

    print("KERNEL_OK")
</pallas_src>

<mosaic_0001>
module attributes {stable_mosaic.version = 11 : i64} {
  func.func @linprob_kernel(%arg0: i32, %arg1: i32, %arg2: memref<8x32xf32, #tpu.memory_space<vmem>>, %arg3: memref<1x32xf32, #tpu.memory_space<vmem>>, %arg4: memref<1x32xf32, #tpu.memory_space<vmem>>, %arg5: memref<32x1024xbf16, #tpu.memory_space<vmem>>, %arg6: memref<1x1024xf32, #tpu.memory_space<vmem>>, %arg7: memref<8x1024xf32, #tpu.memory_space<vmem>>) attributes {dimension_semantics = [#tpu.dimension_semantics<parallel>, #tpu.dimension_semantics<parallel>], iteration_bounds = array<i64: 1, 1>, scalar_prefetch = 0 : i64, scratch_operands = 0 : i64, tpu.core_type = #tpu.core_type<tc>, window_params = [{transform_indices = @transform_0, window_bounds = array<i64: 8, 32>}, {pipeline_mode = #tpu.pipeline_mode<synchronous>, transform_indices = @transform_1, window_bounds = array<i64: 1, 32>}, {pipeline_mode = #tpu.pipeline_mode<synchronous>, transform_indices = @transform_2, window_bounds = array<i64: 1, 32>}, {transform_indices = @transform_3, window_bounds = array<i64: 32, 1024>}, {transform_indices = @transform_4, window_bounds = array<i64: 1, 1024>}, {transform_indices = @transform_5, window_bounds = array<i64: 8, 1024>}]} {
    %c0 = arith.constant 0 : index
    %c0_0 = arith.constant 0 : index
    %0 = vector.load %arg2[%c0, %c0_0] : memref<8x32xf32, #tpu.memory_space<vmem>>, vector<8x32xf32>
    %c0_1 = arith.constant 0 : index
    %c0_2 = arith.constant 0 : index
    %1 = vector.load %arg3[%c0_1, %c0_2] : memref<1x32xf32, #tpu.memory_space<vmem>>, vector<1x32xf32>
    %2 = vector.broadcast %1 : vector<1x32xf32> to vector<8x32xf32>
    %3 = arith.subf %0, %2 : vector<8x32xf32>
    %c0_3 = arith.constant 0 : index
    %c0_4 = arith.constant 0 : index
    %4 = vector.load %arg4[%c0_3, %c0_4] : memref<1x32xf32, #tpu.memory_space<vmem>>, vector<1x32xf32>
    %5 = vector.broadcast %4 : vector<1x32xf32> to vector<8x32xf32>
    %6 = arith.mulf %3, %5 : vector<8x32xf32>
    %7 = arith.truncf %6 : vector<8x32xf32> to vector<8x32xbf16>
    %c0_5 = arith.constant 0 : index
    %c0_6 = arith.constant 0 : index
    %8 = vector.load %arg5[%c0_5, %c0_6] : memref<32x1024xbf16, #tpu.memory_space<vmem>>, vector<32x1024xbf16>
    %cst = arith.constant dense<0.000000e+00> : vector<8x1024xf32>
    %9 = tpu.matmul %7, %8, %cst {dimension_numbers = #tpu.dot_dimension_numbers<[1], [0], [0], [1], [0, 0, 1, 1], [], []>} : vector<8x32xbf16>, vector<32x1024xbf16>, vector<8x1024xf32> -> vector<8x1024xf32>
    %c0_7 = arith.constant 0 : index
    %c0_8 = arith.constant 0 : index
    %10 = vector.load %arg6[%c0_7, %c0_8] : memref<1x1024xf32, #tpu.memory_space<vmem>>, vector<1x1024xf32>
    %11 = vector.broadcast %10 : vector<1x1024xf32> to vector<8x1024xf32>
    %12 = arith.addf %9, %11 : vector<8x1024xf32>
    %c0_9 = arith.constant 0 : index
    %c0_10 = arith.constant 0 : index
    %13 = vector.load %arg7[%c0_9, %c0_10] : memref<8x1024xf32, #tpu.memory_space<vmem>>, vector<8x1024xf32>
    tpu.vector_store %arg7[%c0_9, %c0_10], %12 {strides = array<i32>} : memref<8x1024xf32, #tpu.memory_space<vmem>>, vector<8x1024xf32>,
    return
  }
  func.func @transform_0(%arg0: i32, %arg1: i32) -> (i32, i32) {
    %c0_i32 = arith.constant 0 : i32
    %c0_i32_0 = arith.constant 0 : i32
    return %arg0, %c0_i32 : i32, i32
  }
  func.func @transform_1(%arg0: i32, %arg1: i32) -> (i32, i32) {
    %c0_i32 = arith.constant 0 : i32
    %c0_i32_0 = arith.constant 0 : i32
    %c0_i32_1 = arith.constant 0 : i32
    return %c0_i32, %c0_i32_0 : i32, i32
  }
  func.func @transform_2(%arg0: i32, %arg1: i32) -> (i32, i32) {
    %c0_i32 = arith.constant 0 : i32
    %c0_i32_0 = arith.constant 0 : i32
    %c0_i32_1 = arith.constant 0 : i32
    return %c0_i32, %c0_i32_0 : i32, i32
  }
  func.func @transform_3(%arg0: i32, %arg1: i32) -> (i32, i32) {
    %c0_i32 = arith.constant 0 : i32
    %c0_i32_0 = arith.constant 0 : i32
    return %c0_i32, %arg1 : i32, i32
  }
  func.func @transform_4(%arg0: i32, %arg1: i32) -> (i32, i32) {
    %c0_i32 = arith.constant 0 : i32
    %c0_i32_0 = arith.constant 0 : i32
    return %c0_i32, %arg1 : i32, i32
  }
  func.func @transform_5(%arg0: i32, %arg1: i32) -> (i32, i32) {
    %c0_i32 = arith.constant 0 : i32
    return %arg0, %arg1 : i32, i32
  }
}

</mosaic_0001>

<llo_original>
// kernel: linprob_forward_prepared.1
$region0: #{linprob_forward_prepared.1}
  #allocation0 [shape = 'u32[]', space=smem, size = 0x4, offset = 0x4, fixed_abs, tag = 'smem constant byte address 0x4 - core index']
  #allocation1 [shape = 'u32[144,128]{1,0:T(1,128)}', space=vmem, size = 0x12000, scoped, tag = 'internal scratch']
  %s0 = inlined_call_operand.vmem [shape: f32[8,32], index: 0, kind: input, shape index: {}]
  %s1 = inlined_call_operand.vmem [shape: f32[1,32], index: 1, kind: input, shape index: {}]
  %s2 = inlined_call_operand.vmem [shape: f32[1,32], index: 2, kind: input, shape index: {}]
  %s3 = inlined_call_operand.hbm [shape: bf16[32,1024], index: 3, kind: input, shape index: {}]
  %s4 = inlined_call_operand.vmem [shape: f32[1,1024], index: 4, kind: input, shape index: {}]
  %s5 = inlined_call_operand.hbm [shape: f32[8,1024], index: 5, kind: output, shape index: {}]
  %s6 = sld [smem:[#allocation0]]
  $region34: #{linprob_forward_prepared.1} parent=0
    _
  %s8 = ssub.s32 1, %s6
  %s9 = scalar_select 0, %s8, %s6
  $region1: #{linprob_forward_prepared.1} parent=0
    #allocation2 [shape = 'u8[65536]{0}', space=vmem, size = 0x10000, scoped, tag = 'input window, operand 3, single buffered']
    #allocation3 [shape = 's32[1]{0}', space=sflag, size = 0x4, scoped, tag = 'scoped memory for linprob_forward_prepared.1']
    #allocation4 [shape = 's32[1]{0}', space=sflag, size = 0x4, scoped, tag = 'scoped memory for linprob_forward_prepared.1']
    #allocation5 [shape = 'u8[32768]{0}', space=vmem, size = 0x8000, scoped, tag = 'output window, operand 0, single buffered']
    %10 = vsyncpa [#allocation3], 0
    %11 = vsyncpa [#allocation4], 0
    // Predicated region
    $region2: #{linprob_forward_prepared.1} parent=1 // pred_check
      _
    $region3: #{linprob_forward_prepared.1} parent=1 // pred_check_branch
      %13 = sbr.rel (0) target = $region5
    $region4: #{linprob_forward_prepared.1} parent=1 // pred_region
      _
    $region5: #{linprob_forward_prepared.1} parent=1 // pred_fallthru
      _
    // Predicated region
    $region6: #{linprob_forward_prepared.1} parent=1 // pred_check
      _
    $region7: #{linprob_forward_prepared.1} parent=1 // pred_check_branch
      %15 = sbr.rel (0) target = $region9
    $region8: #{linprob_forward_prepared.1} parent=1 // pred_region
      _
    $region9: #{linprob_forward_prepared.1} parent=1 // pred_fallthru
      _
    // Predicated region
    $region10: #{linprob_forward_prepared.1} parent=1 // pred_check
      _
    $region11: #{linprob_forward_prepared.1} parent=1 // pred_check_branch
      %17 = sbr.rel (0) target = $region13
    $region12: #{linprob_forward_prepared.1} parent=1 // pred_region
      _
    $region13: #{linprob_forward_prepared.1} parent=1 // pred_fallthru
      _
    // Predicated region
    $region14: #{linprob_forward_prepared.1} parent=1 // pred_check
      _
    $region15: #{linprob_forward_prepared.1} parent=1 // pred_check_branch
      %19 = sbr.rel (0) target = $region17
    $region16: #{linprob_forward_prepared.1} parent=1 // pred_region
      %s21 = ssub.s32 2048, 2048
      %22 = vsyncadd [#allocation3], %s21
      %s23 = sshll.u32 [#allocation2], 4
      %s24 = int_to_ptr.vmem [resolvable:$true] %s23
      %29 = dma.hbm_to_vmem [thread:$0]  %s3, 2048, %s24, [#allocation3], 512, 512, 32
    $region17: #{linprob_forward_prepared.1} parent=1 // pred_fallthru
      _
    // Predicated region
    $region18: #{linprob_forward_prepared.1} parent=1 // pred_check
      _
    $region19: #{linprob_forward_prepared.1} parent=1 // pred_check_branch
      %31 = sbr.rel (0) target = $region21
    $region20: #{linprob_forward_prepared.1} parent=1 // pred_region
      _
    $region21: #{linprob_forward_prepared.1} parent=1 // pred_fallthru
      _
    // Predicated region
    $region22: #{linprob_forward_prepared.1} parent=1 // pred_check
      _
    $region23: #{linprob_forward_prepared.1} parent=1 // pred_check_branch
      %33 = sbr.rel (0) target = $region25
    $region24: #{linprob_forward_prepared.1} parent=1 // pred_region
      %34 = dma.done [#allocation3], 2048
    $region25: #{linprob_forward_prepared.1} parent=1 // pred_fallthru
      _
    %v36 = vld [vmem:[%s0] sm:$0xff]
    %v37 = vld [vmem:[%s1] sm:$0x1]
    %v39 = vlaneseq
    %v40 = vshrl.u32 %v39, 7
    %v41 = vsub.s32 0, %v40
    %v42 = vrot.slane %v37, %v41
    %v44 = vsub.f32 %v36, %v42
    %v45 = vld [vmem:[%s2] sm:$0x1]
    %v47 = vlaneseq
    %v48 = vshrl.u32 %v47, 7
    %v49 = vsub.s32 0, %v48
    %v50 = vrot.slane %v45, %v49
    %v52 = vmul.f32 %v44, %v50
    %v53 = vpack.c.bf16 %v52, %v52
    %v54 = vld [vmem:[#allocation2] sm:$0xff]
    %v55 = vld [vmem:[#allocation2 + $0x8] sm:$0xff]
    %v56 = vld [vmem:[#allocation2 + $0x10] sm:$0xff]
    %v57 = vld [vmem:[#allocation2 + $0x18] sm:$0xff]
    %v58 = vld [vmem:[#allocation2 + $0x20] sm:$0xff]
    %v59 = vld [vmem:[#allocation2 + $0x28] sm:$0xff]
    %v60 = vld [vmem:[#allocation2 + $0x30] sm:$0xff]
    %v61 = vld [vmem:[#allocation2 + $0x38] sm:$0xff]
    %v62 = vld [vmem:[#allocation2 + $0x40] sm:$0xff]
    %v63 = vld [vmem:[#allocation2 + $0x48] sm:$0xff]
    %v64 = vld [vmem:[#allocation2 + $0x50] sm:$0xff]
    %v65 = vld [vmem:[#allocation2 + $0x58] sm:$0xff]
    %v66 = vld [vmem:[#allocation2 + $0x60] sm:$0xff]
    %v67 = vld [vmem:[#allocation2 + $0x68] sm:$0xff]
    %v68 = vld [vmem:[#allocation2 + $0x70] sm:$0xff]
    %v69 = vld [vmem:[#allocation2 + $0x78] sm:$0xff]
    %v70 = vld [vmem:[%s4] sm:$0xff]
    %v72 = vlaneseq
    %v73 = vshrl.u32 %v72, 7
    %v74 = vsub.s32 0, %v73
    %v75 = vrot.slane %v70, %v74
    %v76 = vlaneseq
    %v77 = vshrl.u32 %v76, 7
    %v78 = vsub.s32 1, %v77
    %v79 = vrot.slane %v70, %v78
    %v80 = vlaneseq
    %v81 = vshrl.u32 %v80, 7
    %v82 = vsub.s32 2, %v81
    %v83 = vrot.slane %v70, %v82
    %v84 = vlaneseq
    %v85 = vshrl.u32 %v84, 7
    %v86 = vsub.s32 3, %v85
    %v87 = vrot.slane %v70, %v86
    %v88 = vlaneseq
    %v89 = vshrl.u32 %v88, 7
    %v90 = vsub.s32 4, %v89
    %v91 = vrot.slane %v70, %v90
    %v92 = vlaneseq
    %v93 = vshrl.u32 %v92, 7
    %v94 = vsub.s32 5, %v93
    %v95 = vrot.slane %v70, %v94
    %v96 = vlaneseq
    %v97 = vshrl.u32 %v96, 7
    %v98 = vsub.s32 6, %v97
    %v99 = vrot.slane %v70, %v98
    %v100 = vlaneseq
    %v101 = vshrl.u32 %v100, 7
    %v102 = vsub.s32 7, %v101
    %v103 = vrot.slane %v70, %v102
    %v128 = vunpack.c.l.b16 %v54
    %v129 = vunpack.c.h.b16 %v54
    %v130 = vunpack.c.l.b16 %v55
    %v131 = vunpack.c.h.b16 %v55
    %v132 = vunpack.c.l.b16 %v56
    %v133 = vunpack.c.h.b16 %v56
    %v134 = vunpack.c.l.b16 %v57
    %v135 = vunpack.c.h.b16 %v57
    %v136 = vunpack.c.l.b16 %v58
    %v137 = vunpack.c.h.b16 %v58
    %v138 = vunpack.c.l.b16 %v59
    %v139 = vunpack.c.h.b16 %v59
    %v140 = vunpack.c.l.b16 %v60
    %v141 = vunpack.c.h.b16 %v60
    %v142 = vunpack.c.l.b16 %v61
    %v143 = vunpack.c.h.b16 %v61
    %v144 = vunpack.c.l.b16 %v62
    %v145 = vunpack.c.h.b16 %v62
    %v146 = vunpack.c.l.b16 %v63
    %v147 = vunpack.c.h.b16 %v63
    %v148 = vunpack.c.l.b16 %v64
    %v149 = vunpack.c.h.b16 %v64
    %v150 = vunpack.c.l.b16 %v65
    %v151 = vunpack.c.h.b16 %v65
    %v152 = vunpack.c.l.b16 %v66
    %v153 = vunpack.c.h.b16 %v66
    %v154 = vunpack.c.l.b16 %v67
    %v155 = vunpack.c.h.b16 %v67
    %v156 = vunpack.c.l.b16 %v68
    %v157 = vunpack.c.h.b16 %v68
    %v158 = vunpack.c.l.b16 %v69
    %v159 = vunpack.c.h.b16 %v69
    %v160 = vpack.c.b16 %v136, %v128
    %v161 = vpack.c.b16 %v137, %v129
    %v162 = vpack.c.b16 %v138, %v130
    %v163 = vpack.c.b16 %v139, %v131
    %v164 = vpack.c.b16 %v140, %v132
    %v165 = vpack.c.b16 %v141, %v133
    %v166 = vpack.c.b16 %v142, %v134
    %v167 = vpack.c.b16 %v143, %v135
    %v168 = vpack.c.b16 %v152, %v144
    %v169 = vpack.c.b16 %v153, %v145
    %v170 = vpack.c.b16 %v154, %v146
    %v171 = vpack.c.b16 %v155, %v147
    %v172 = vpack.c.b16 %v156, %v148
    %v173 = vpack.c.b16 %v157, %v149
    %v174 = vpack.c.b16 %v158, %v150
    %v175 = vpack.c.b16 %v159, %v151
    %vm192 = vcmask 261120
    %v194 = vsel %vm192, %v53, 0
    %196 = vmatprep.subr.bf16.mxu0 %v161
    %197 = vmatpush1.bf16.msra.mxu0 %v160
    %198 = vmatprep.subr.bf16.mxu0 %v169
    %199 = vmatpush1.bf16.msra.mxu0 %v168
    %200 = vmatprep.subr.bf16.mxu0 0
    %201 = vmatpush1.bf16.msra.mxu0 0
    %202 = vmatprep.subr.bf16.mxu0 0
    %203 = vmatpush1.bf16.msra.mxu0 0
    %204 = vmatprep.subr.bf16.mxu0 0
    %205 = vmatpush1.bf16.msra.mxu0 0
    %206 = vmatprep.subr.bf16.mxu0 0
    %207 = vmatpush1.bf16.msra.mxu0 0
    %208 = vmatprep.subr.bf16.mxu0 0
    %209 = vmatpush1.bf16.msra.mxu0 0
    %210 = vmatprep.subr.bf16.mxu0 0
    %211 = vmatpush1.bf16.msra.mxu0 0
    %212 = vmatprep.subr.bf16.mxu0 0
    %213 = vmatpush1.bf16.msra.mxu0 0
    %214 = vmatprep.subr.bf16.mxu0 0
    %215 = vmatpush1.bf16.msra.mxu0 0
    %216 = vmatprep.subr.bf16.mxu0 0
    %217 = vmatpush1.bf16.msra.mxu0 0
    %218 = vmatprep.subr.bf16.mxu0 0
    %219 = vmatpush1.bf16.msra.mxu0 0
    %220 = vmatprep.subr.bf16.mxu0 0
    %221 = vmatpush1.bf16.msra.mxu0 0
    %222 = vmatprep.subr.bf16.mxu0 0
    %223 = vmatpush1.bf16.msra.mxu0 0
    %224 = vmatprep.subr.bf16.mxu0 0
    %225 = vmatpush1.bf16.msra.mxu0 0
    %226 = vmatprep.subr.bf16.mxu0 0
    %227 = vmatpush1.bf16.msra.mxu0 0
    %228 = vmatprep.mubr.bf16.mxu0 0
    %229 = vmatmul.mubr.bf16.gmra.mrb[0].mxu0 %v194
    %v230 = vpop.f32.mrb[0].mxu0
    %v231 = vadd.f32 %v75, %v230
    %v232 = vpop.f32.mrb[0].mxu0
    %v233 = vadd.f32 %v79, %v232
    %v234 = vpop.f32.mrb[0].mxu0
    %v235 = vpop.f32.mrb[0].mxu0
    %236 = vdwg.mxu0
    %237 = vmatprep.subr.bf16.mxu0 %v163
    %238 = vmatpush1.bf16.msra.mxu0 %v162
    %239 = vmatprep.subr.bf16.mxu0 %v171
    %240 = vmatpush1.bf16.msra.mxu0 %v170
    %241 = vmatprep.subr.bf16.mxu0 0
    %242 = vmatpush1.bf16.msra.mxu0 0
    %243 = vmatprep.subr.bf16.mxu0 0
    %244 = vmatpush1.bf16.msra.mxu0 0
    %245 = vmatprep.subr.bf16.mxu0 0
    %246 = vmatpush1.bf16.msra.mxu0 0
    %247 = vmatprep.subr.bf16.mxu0 0
    %248 = vmatpush1.bf16.msra.mxu0 0
    %249 = vmatprep.subr.bf16.mxu0 0
    %250 = vmatpush1.bf16.msra.mxu0 0
    %251 = vmatprep.subr.bf16.mxu0 0
    %252 = vmatpush1.bf16.msra.mxu0 0
    %253 = vmatprep.subr.bf16.mxu0 0
    %254 = vmatpush1.bf16.msra.mxu0 0
    %255 = vmatprep.subr.bf16.mxu0 0
    %256 = vmatpush1.bf16.msra.mxu0 0
    %257 = vmatprep.subr.bf16.mxu0 0
    %258 = vmatpush1.bf16.msra.mxu0 0
    %259 = vmatprep.subr.bf16.mxu0 0
    %260 = vmatpush1.bf16.msra.mxu0 0
    %261 = vmatprep.subr.bf16.mxu0 0
    %262 = vmatpush1.bf16.msra.mxu0 0
    %263 = vmatprep.subr.bf16.mxu0 0
    %264 = vmatpush1.bf16.msra.mxu0 0
    %265 = vmatprep.subr.bf16.mxu0 0
    %266 = vmatpush1.bf16.msra.mxu0 0
    %267 = vmatprep.subr.bf16.mxu0 0
    %268 = vmatpush1.bf16.msra.mxu0 0
    %269 = vmatprep.mubr.bf16.mxu0 0
    %270 = vmatmul.mubr.bf16.gmra.mrb[0].mxu0 %v194
    %v271 = vpop.f32.mrb[0].mxu0
    %v272 = vadd.f32 %v83, %v271
    %v273 = vpop.f32.mrb[0].mxu0
    %v274 = vadd.f32 %v87, %v273
    %v275 = vpop.f32.mrb[0].mxu0
    %v276 = vpop.f32.mrb[0].mxu0
    %277 = vdwg.mxu0
    %278 = vmatprep.subr.bf16.mxu0 %v165
    %279 = vmatpush1.bf16.msra.mxu0 %v164
    %280 = vmatprep.subr.bf16.mxu0 %v173
    %281 = vmatpush1.bf16.msra.mxu0 %v172
    %282 = vmatprep.subr.bf16.mxu0 0
    %283 = vmatpush1.bf16.msra.mxu0 0
    %284 = vmatprep.subr.bf16.mxu0 0
    %285 = vmatpush1.bf16.msra.mxu0 0
    %286 = vmatprep.subr.bf16.mxu0 0
    %287 = vmatpush1.bf16.msra.mxu0 0
    %288 = vmatprep.subr.bf16.mxu0 0
    %289 = vmatpush1.bf16.msra.mxu0 0
    %290 = vmatprep.subr.bf16.mxu0 0
    %291 = vmatpush1.bf16.msra.mxu0 0
    %292 = vmatprep.subr.bf16.mxu0 0
    %293 = vmatpush1.bf16.msra.mxu0 0
    %294 = vmatprep.subr.bf16.mxu0 0
    %295 = vmatpush1.bf16.msra.mxu0 0
    %296 = vmatprep.subr.bf16.mxu0 0
    %297 = vmatpush1.bf16.msra.mxu0 0
    %298 = vmatprep.subr.bf16.mxu0 0
    %299 = vmatpush1.bf16.msra.mxu0 0
    %300 = vmatprep.subr.bf16.mxu0 0
    %301 = vmatpush1.bf16.msra.mxu0 0
    %302 = vmatprep.subr.bf16.mxu0 0
    %303 = vmatpush1.bf16.msra.mxu0 0
    %304 = vmatprep.subr.bf16.mxu0 0
    %305 = vmatpush1.bf16.msra.mxu0 0
    %306 = vmatprep.subr.bf16.mxu0 0
    %307 = vmatpush1.bf16.msra.mxu0 0
    %308 = vmatprep.subr.bf16.mxu0 0
    %309 = vmatpush1.bf16.msra.mxu0 0
    %310 = vmatprep.mubr.bf16.mxu0 0
    %311 = vmatmul.mubr.bf16.gmra.mrb[0].mxu0 %v194
    %v312 = vpop.f32.mrb[0].mxu0
    %v313 = vadd.f32 %v91, %v312
    %v314 = vpop.f32.mrb[0].mxu0
    %v315 = vadd.f32 %v95, %v314
    %v316 = vpop.f32.mrb[0].mxu0
    %v317 = vpop.f32.mrb[0].mxu0
    %318 = vdwg.mxu0
    %319 = vmatprep.subr.bf16.mxu0 %v167
    %320 = vmatpush1.bf16.msra.mxu0 %v166
    %321 = vmatprep.subr.bf16.mxu0 %v175
    %322 = vmatpush1.bf16.msra.mxu0 %v174
    %323 = vmatprep.subr.bf16.mxu0 0
    %324 = vmatpush1.bf16.msra.mxu0 0
    %325 = vmatprep.subr.bf16.mxu0 0
    %326 = vmatpush1.bf16.msra.mxu0 0
    %327 = vmatprep.subr.bf16.mxu0 0
    %328 = vmatpush1.bf16.msra.mxu0 0
    %329 = vmatprep.subr.bf16.mxu0 0
    %330 = vmatpush1.bf16.msra.mxu0 0
    %331 = vmatprep.subr.bf16.mxu0 0
    %332 = vmatpush1.bf16.msra.mxu0 0
    %333 = vmatprep.subr.bf16.mxu0 0
    %334 = vmatpush1.bf16.msra.mxu0 0
    %335 = vmatprep.subr.bf16.mxu0 0
    %336 = vmatpush1.bf16.msra.mxu0 0
    %337 = vmatprep.subr.bf16.mxu0 0
    %338 = vmatpush1.bf16.msra.mxu0 0
    %339 = vmatprep.subr.bf16.mxu0 0
    %340 = vmatpush1.bf16.msra.mxu0 0
    %341 = vmatprep.subr.bf16.mxu0 0
    %342 = vmatpush1.bf16.msra.mxu0 0
    %343 = vmatprep.subr.bf16.mxu0 0
    %344 = vmatpush1.bf16.msra.mxu0 0
    %345 = vmatprep.subr.bf16.mxu0 0
    %346 = vmatpush1.bf16.msra.mxu0 0
    %347 = vmatprep.subr.bf16.mxu0 0
    %348 = vmatpush1.bf16.msra.mxu0 0
    %349 = vmatprep.subr.bf16.mxu0 0
    %350 = vmatpush1.bf16.msra.mxu0 0
    %351 = vmatprep.mubr.bf16.mxu0 0
    %352 = vmatmul.mubr.bf16.gmra.mrb[0].mxu0 %v194
    %v353 = vpop.f32.mrb[0].mxu0
    %v354 = vadd.f32 %v99, %v353
    %v355 = vpop.f32.mrb[0].mxu0
    %v356 = vadd.f32 %v103, %v355
    %v357 = vpop.f32.mrb[0].mxu0
    %v358 = vpop.f32.mrb[0].mxu0
    %359 = vdwg.mxu0
    %360 = vst [vmem:[#allocation5] sm:$0xff] %v231
    %361 = vst [vmem:[#allocation5 + $0x8] sm:$0xff] %v233
    %362 = vst [vmem:[#allocation5 + $0x10] sm:$0xff] %v272
    %363 = vst [vmem:[#allocation5 + $0x18] sm:$0xff] %v274
    %364 = vst [vmem:[#allocation5 + $0x20] sm:$0xff] %v313
    %365 = vst [vmem:[#allocation5 + $0x28] sm:$0xff] %v315
    %366 = vst [vmem:[#allocation5 + $0x30] sm:$0xff] %v354
    %367 = vst [vmem:[#allocation5 + $0x38] sm:$0xff] %v356
    // Predicated region
    $region26: #{linprob_forward_prepared.1} parent=1 // pred_check
      _
    $region27: #{linprob_forward_prepared.1} parent=1 // pred_check_branch
      %369 = sbr.rel (0) target = $region29
    $region28: #{linprob_forward_prepared.1} parent=1 // pred_region
      %s371 = ssub.s32 1024, 1024
      %372 = vsyncadd [#allocation4], %s371
      %s374 = sshll.u32 [#allocation5], 4
      %s375 = int_to_ptr.vmem [resolvable:$true] %s374
      %377 = dma.vmem_to_hbm [thread:$0]  %s375, 1024, %s5, [#allocation4]
    $region29: #{linprob_forward_prepared.1} parent=1 // pred_fallthru
      _
    // Predicated region
    $region30: #{linprob_forward_prepared.1} parent=1 // pred_check
      _
    $region31: #{linprob_forward_prepared.1} parent=1 // pred_check_branch
      %379 = sbr.rel (0) target = $region33
    $region32: #{linprob_forward_prepared.1} parent=1 // pred_region
      %380 = dma.done [#allocation4], 1024
    $region33: #{linprob_forward_prepared.1} parent=1 // pred_fallthru
      _
    %381 = vsyncpa [#allocation3], 1
    %382 = vsyncpa [#allocation4], 1

</llo_original>
